<compile_context>
chip_gen: v7x
topology: tpu7x:2x2x1
jax: 0.10.0
libtpu: 0.0.40
codegen_flags: <defaults>
</compile_context>

<pallas_src>
import functools

import jax
import jax.numpy as jnp
import numpy as np
from jax import lax
from jax.experimental import pallas as pl
from jax.experimental.pallas import tpu as pltpu

_LANE = 128


def _vf_kernel(s_ref, xg_ref, yg_ref, w2_ref, o_ref, *, l, f, d):
    # s_ref  : [d, tile_n]   query points tile (streamed)
    # xg_ref : [f, 1]        meshgrid x-axis values (resident)
    # yg_ref : [f, 1]        meshgrid y-axis values (resident)
    # w2_ref : [d*f, f]      weights remapped: W2[j*f + r, c] = weights[r*f + c, j] (resident)
    # o_ref  : [d, tile_n]   velocity-field values
    s = s_ref[...].astype(jnp.float32)                  # [d, tn]
    sx = s[0:1, :]                                      # [1, tn]
    sy = s[1:2, :]                                      # [1, tn]

    dx = sx - xg_ref[...]                               # [f, tn] broadcast subtract
    dy = sy - yg_ref[...]                               # [f, tn]
    gx = jnp.exp((-l) * (dx * dx))                      # [f, tn]  (EUP)
    gy = jnp.exp((-l) * (dy * dy))                      # [f, tn]  (EUP)

    # T[j*f + r, n] = sum_c weights[r*f + c, j] * Gx[c, n]      (tiny MXU matmul)
    t = lax.dot_general(
        w2_ref[...].astype(jnp.float32), gx,
        dimension_numbers=(((1,), (0,)), ((), ())),
        preferred_element_type=jnp.float32)             # [d*f, tn]

    # out[j, n] = sum_r T[j*f + r, n] * Gy[r, n]        (VPU multiply + sublane reduce)
    rows = []
    for j in range(d):                                  # d is a small static int
        tj = t[j * f:(j + 1) * f, :]                    # static, sublane-aligned slice
        rows.append(jnp.sum(tj * gy, axis=0, keepdims=True))
    o_ref[...] = jnp.concatenate(rows, axis=0)          # [d, tn] single lane-dense store


def velocity_field(s, s_hat, weights, *, l, tile_n_max=32768,
                   vmem_budget_bytes=20 << 20):
    d, n = s.shape
    m, d2 = s_hat.shape
    assert d == d2 == 2, "separable kernel assumes the module's 2-D meshgrid"
    assert weights.shape == (m, d)
    f = int(round(np.sqrt(m)))
    assert f * f == m
    l = float(l)

    # --- extract the separable meshgrid axes (host side, once) ----------------
    s_hat_np = np.asarray(s_hat, dtype=np.float32)
    xg_np = s_hat_np[:f, 0]          # x varies fastest (meshgrid columns)
    yg_np = s_hat_np[::f, 1]         # y varies per row
    recon = np.stack([np.tile(xg_np, f), np.repeat(yg_np, f)], axis=1)
    if not np.allclose(recon, s_hat_np, atol=1e-6):
        # TODO(synk): non-meshgrid inducing states need the dense F^2-exp kernel
        raise NotImplementedError("s_hat does not have separable meshgrid structure")

    # weights[r*f + c, j]  ->  W2[j*f + r, c]
    w2 = jnp.transpose(jnp.asarray(weights, jnp.float32).reshape(f, f, d),
                       (2, 0, 1)).reshape(d * f, f)
    xg = jnp.asarray(xg_np.reshape(f, 1), jnp.float32)
    yg = jnp.asarray(yg_np.reshape(f, 1), jnp.float32)

    # --- tile selection --------------------------------------------------------
    # f32 bytes per column of VMEM: double-buffered s & out tiles (4d) plus the
    # in-kernel temporaries dx,dy,gx,gy (4f), T (d*f) and reduce temps (~f).
    bytes_per_col = 4 * (4 * d + 5 * f + d * f)
    vmem_cols = max(_LANE, (vmem_budget_bytes // max(bytes_per_col, 1)) // _LANE * _LANE)
    tile_cap = max(_LANE, min(tile_n_max, vmem_cols))

    n_cols = pl.cdiv(n, _LANE) * _LANE               # lane-padded column count
    kind = jax.devices()[0].device_kind.lower()
    is_v7 = "7" in kind                              # 2 TensorCores per chip

    if n_cols <= tile_cap:
        tile_n = n_cols                              # single grid step (no forced split)
    else:
        num_tiles = pl.cdiv(n_cols, tile_cap)
        if is_v7 and num_tiles % 2:                  # even split across v7x's 2 TCs
            num_tiles += 1
        tile_n = pl.cdiv(n_cols // _LANE, num_tiles) * _LANE
    n_pad = pl.cdiv(n, tile_n) * tile_n
    grid_len = n_pad // tile_n

    s = jnp.asarray(s, jnp.float32)
    if n_pad != n:
        # padded columns are computed (finite, k <= 1) and sliced off below
        s = jnp.pad(s, ((0, 0), (0, n_pad - n)))

    # Only CORE_PARALLEL alters cross-TC codegen; gate it on v7x and a multi-tile grid.
    if is_v7 and grid_len >= 2:
        dim_sem = (pltpu.CORE_PARALLEL,)
    else:
        dim_sem = ("parallel",)

    cost = pl.CostEstimate(
        flops=2 * (d * f) * f * n_pad + (6 * f + 3 * d * f) * n_pad,
        transcendentals=2 * f * n_pad,               # 2F exps per query point
        bytes_accessed=4 * (2 * d * n_pad + 2 * f + d * f * f),
    )

    kernel = functools.partial(_vf_kernel, l=l, f=f, d=d)
    out = pl.pallas_call(
        kernel,
        out_shape=jax.ShapeDtypeStruct((d, n_pad), jnp.float32),
        grid_spec=pltpu.PrefetchScalarGridSpec(
            num_scalar_prefetch=0,
            grid=(grid_len,),
            in_specs=[
                pl.BlockSpec((d, tile_n), lambda i: (0, i)),   # s tile (streamed)
                pl.BlockSpec((f, 1), lambda i: (0, 0)),        # x grid (resident)
                pl.BlockSpec((f, 1), lambda i: (0, 0)),        # y grid (resident)
                pl.BlockSpec((d * f, f), lambda i: (0, 0)),    # W2 (resident)
            ],
            out_specs=pl.BlockSpec((d, tile_n), lambda i: (0, i)),
        ),
        compiler_params=pltpu.CompilerParams(dimension_semantics=dim_sem),
        cost_estimate=cost,
    )(s, xg, yg, w2)
    return out[:, :n]


def make_inducing_states(num_inducing):
    # mirrors Induced_GaussianRBF.__init__ with normalize=True
    x = np.linspace(-0.5, 0.5, num_inducing)
    y = np.linspace(-0.5, 0.5, num_inducing)
    X, Y = np.meshgrid(x, y)
    return jnp.asarray(
        np.concatenate((X.reshape(-1, 1), Y.reshape(-1, 1)), axis=1).astype(np.float32))


def reference(s, s_hat, weights, l):
    # pure-JAX mirror of the PyTorch forward (rff=False, batched tensor input)
    diff = s[None, :, :] - s_hat[:, :, None] + 1e-22          # [m, d, N]
    norm = jnp.sqrt(jnp.sum(diff * diff, axis=1))             # [m, N]
    k = jnp.exp(-l * norm ** 2)                               # [m, N]
    return weights.T @ k                                      # [d, N]


if __name__ == "__main__":
    num_features = 8          # -> m = 64 inducing states
    dim = 2
    l = 20.0
    n_points = 256            # batch of query points

    m = num_features ** 2

    key = jax.random.PRNGKey(0)
    k_w, k_s = jax.random.split(key)

    # deterministic parameter init (uniform(-1/sqrt(m), 1/sqrt(m)), as in __init__)
    weights = jax.random.uniform(
        k_w, (m, dim), dtype=jnp.float32,
        minval=-1.0 / np.sqrt(m), maxval=1.0 / np.sqrt(m))
    s_hat = make_inducing_states(num_features)                 # [m, 2]

    # query points, shape (d, N) = (2, 256)
    s = jax.random.uniform(k_s, (dim, n_points), dtype=jnp.float32,
                           minval=-0.5, maxval=0.5)

    out = velocity_field(s, s_hat, weights, l=l)
    out = jax.block_until_ready(out)

    ref = reference(s, s_hat, weights, l)
    np.testing.assert_allclose(np.asarray(out), np.asarray(ref),
                               rtol=1e-4, atol=1e-4)

    print("KERNEL_OK")
</pallas_src>

<mosaic_0001>
module attributes {stable_mosaic.version = 11 : i64} {
  func.func @_vf_kernel(%arg0: i32, %arg1: memref<2x256xf32, #tpu.memory_space<vmem>>, %arg2: memref<8x1xf32, #tpu.memory_space<vmem>>, %arg3: memref<8x1xf32, #tpu.memory_space<vmem>>, %arg4: memref<16x8xf32, #tpu.memory_space<vmem>>, %arg5: memref<2x256xf32, #tpu.memory_space<vmem>>) attributes {dimension_semantics = [#tpu.dimension_semantics<parallel>], iteration_bounds = array<i64: 1>, scalar_prefetch = 0 : i64, scratch_operands = 0 : i64, tpu.core_type = #tpu.core_type<tc>, window_params = [{transform_indices = @transform_0, window_bounds = array<i64: 2, 256>}, {pipeline_mode = #tpu.pipeline_mode<synchronous>, transform_indices = @transform_1, window_bounds = array<i64: 8, 1>}, {pipeline_mode = #tpu.pipeline_mode<synchronous>, transform_indices = @transform_2, window_bounds = array<i64: 8, 1>}, {pipeline_mode = #tpu.pipeline_mode<synchronous>, transform_indices = @transform_3, window_bounds = array<i64: 16, 8>}, {transform_indices = @transform_4, window_bounds = array<i64: 2, 256>}]} {
    %c0 = arith.constant 0 : index
    %c0_0 = arith.constant 0 : index
    %0 = vector.load %arg1[%c0, %c0_0] : memref<2x256xf32, #tpu.memory_space<vmem>>, vector<2x256xf32>
    %1 = vector.extract_strided_slice %0 {offsets = [0, 0], sizes = [1, 256], strides = [1, 1]} : vector<2x256xf32> to vector<1x256xf32>
    %2 = vector.extract_strided_slice %0 {offsets = [1, 0], sizes = [1, 256], strides = [1, 1]} : vector<2x256xf32> to vector<1x256xf32>
    %c0_1 = arith.constant 0 : index
    %c0_2 = arith.constant 0 : index
    %3 = vector.load %arg2[%c0_1, %c0_2] : memref<8x1xf32, #tpu.memory_space<vmem>>, vector<8x1xf32>
    %4 = vector.broadcast %1 : vector<1x256xf32> to vector<8x256xf32>
    %5 = vector.broadcast %3 : vector<8x1xf32> to vector<8x256xf32>
    %6 = arith.subf %4, %5 : vector<8x256xf32>
    %c0_3 = arith.constant 0 : index
    %c0_4 = arith.constant 0 : index
    %7 = vector.load %arg3[%c0_3, %c0_4] : memref<8x1xf32, #tpu.memory_space<vmem>>, vector<8x1xf32>
    %8 = vector.broadcast %2 : vector<1x256xf32> to vector<8x256xf32>
    %9 = vector.broadcast %7 : vector<8x1xf32> to vector<8x256xf32>
    %10 = arith.subf %8, %9 : vector<8x256xf32>
    %11 = arith.mulf %6, %6 : vector<8x256xf32>
    %cst = arith.constant -2.000000e+01 : f32
    %12 = vector.broadcast %cst : f32 to vector<8x256xf32>
    %13 = arith.mulf %12, %11 : vector<8x256xf32>
    %14 = math.exp %13 : vector<8x256xf32>
    %15 = arith.mulf %10, %10 : vector<8x256xf32>
    %cst_5 = arith.constant -2.000000e+01 : f32
    %16 = vector.broadcast %cst_5 : f32 to vector<8x256xf32>
    %17 = arith.mulf %16, %15 : vector<8x256xf32>
    %18 = math.exp %17 : vector<8x256xf32>
    %c0_6 = arith.constant 0 : index
    %c0_7 = arith.constant 0 : index
    %19 = vector.load %arg4[%c0_6, %c0_7] : memref<16x8xf32, #tpu.memory_space<vmem>>, vector<16x8xf32>
    %cst_8 = arith.constant dense<0.000000e+00> : vector<16x256xf32>
    %20 = tpu.matmul %19, %14, %cst_8 {dimension_numbers = #tpu.dot_dimension_numbers<[1], [0], [0], [1], [0, 0, 1, 1], [], []>} : vector<16x8xf32>, vector<8x256xf32>, vector<16x256xf32> -> vector<16x256xf32>
    %21 = vector.extract_strided_slice %20 {offsets = [0, 0], sizes = [8, 256], strides = [1, 1]} : vector<16x256xf32> to vector<8x256xf32>
    %22 = arith.mulf %21, %18 : vector<8x256xf32>
    %cst_9 = arith.constant dense<0.000000e+00> : vector<256xf32>
    %23 = vector.multi_reduction <add>, %22, %cst_9 [0] : vector<8x256xf32> to vector<256xf32>
    %24 = vector.shape_cast %23 : vector<256xf32> to vector<1x256xf32>
    %25 = vector.extract_strided_slice %20 {offsets = [8, 0], sizes = [8, 256], strides = [1, 1]} : vector<16x256xf32> to vector<8x256xf32>
    %26 = arith.mulf %25, %18 : vector<8x256xf32>
    %cst_10 = arith.constant dense<0.000000e+00> : vector<256xf32>
    %27 = vector.multi_reduction <add>, %26, %cst_10 [0] : vector<8x256xf32> to vector<256xf32>
    %28 = vector.shape_cast %27 : vector<256xf32> to vector<1x256xf32>
    %29 = tpu.concatenate %24, %28 in 0 : vector<1x256xf32>, vector<1x256xf32> -> vector<2x256xf32>
    %c0_11 = arith.constant 0 : index
    %c0_12 = arith.constant 0 : index
    %30 = vector.load %arg5[%c0_11, %c0_12] : memref<2x256xf32, #tpu.memory_space<vmem>>, vector<2x256xf32>
    tpu.vector_store %arg5[%c0_11, %c0_12], %29 {strides = array<i32>} : memref<2x256xf32, #tpu.memory_space<vmem>>, vector<2x256xf32>,
    return
  }
  func.func @transform_0(%arg0: i32) -> (i32, i32) {
    %c0_i32 = arith.constant 0 : i32
    %c0_i32_0 = arith.constant 0 : i32
    return %c0_i32, %arg0 : i32, i32
  }
  func.func @transform_1(%arg0: i32) -> (i32, i32) {
    %c0_i32 = arith.constant 0 : i32
    %c0_i32_0 = arith.constant 0 : i32
    %c0_i32_1 = arith.constant 0 : i32
    return %c0_i32, %c0_i32_0 : i32, i32
  }
  func.func @transform_2(%arg0: i32) -> (i32, i32) {
    %c0_i32 = arith.constant 0 : i32
    %c0_i32_0 = arith.constant 0 : i32
    %c0_i32_1 = arith.constant 0 : i32
    return %c0_i32, %c0_i32_0 : i32, i32
  }
  func.func @transform_3(%arg0: i32) -> (i32, i32) {
    %c0_i32 = arith.constant 0 : i32
    %c0_i32_0 = arith.constant 0 : i32
    %c0_i32_1 = arith.constant 0 : i32
    return %c0_i32, %c0_i32_0 : i32, i32
  }
  func.func @transform_4(%arg0: i32) -> (i32, i32) {
    %c0_i32 = arith.constant 0 : i32
    %c0_i32_0 = arith.constant 0 : i32
    return %c0_i32, %arg0 : i32, i32
  }
}

</mosaic_0001>

<llo_original>
// kernel: tpu_custom_call.1
$region0: #{tpu_custom_call.1}
  #allocation0 [shape = 'u32[]', space=smem, size = 0x4, offset = 0x4, fixed_abs, tag = 'smem constant byte address 0x4 - core index']
  #allocation1 [shape = 'u32[144,128]{1,0:T(1,128)}', space=vmem, size = 0x12000, scoped, tag = 'internal scratch']
  %s0 = inlined_call_operand.vmem [shape: f32[2,256], index: 0, kind: input, shape index: {}]
  %s1 = inlined_call_operand.vmem [shape: f32[8,1], index: 1, kind: input, shape index: {}]
  %s2 = inlined_call_operand.vmem [shape: f32[8,1], index: 2, kind: input, shape index: {}]
  %s3 = inlined_call_operand.vmem [shape: f32[16,8], index: 3, kind: input, shape index: {}]
  %s4 = inlined_call_operand.hbm [shape: f32[2,256], index: 4, kind: output, shape index: {}]
  %s5 = sld [smem:[#allocation0]]
  $region26: #{tpu_custom_call.1} parent=0
    _
  %s7 = ssub.s32 1, %s5
  %s8 = scalar_select 0, %s7, %s5
  $region1: #{tpu_custom_call.1} parent=0
    #allocation2 [shape = 'u8[2048]{0}', space=vmem, size = 0x800, scoped, tag = 'output window, operand 0, single buffered']
    #allocation3 [shape = 's32[1]{0}', space=sflag, size = 0x4, scoped, tag = 'scoped memory for tpu_custom_call.1']
    %9 = vsyncpa [#allocation3], 0
    // Predicated region
    $region2: #{tpu_custom_call.1} parent=1 // pred_check
      _
    $region3: #{tpu_custom_call.1} parent=1 // pred_check_branch
      %11 = sbr.rel (0) target = $region5
    $region4: #{tpu_custom_call.1} parent=1 // pred_region
      _
    $region5: #{tpu_custom_call.1} parent=1 // pred_fallthru
      _
    // Predicated region
    $region6: #{tpu_custom_call.1} parent=1 // pred_check
      _
    $region7: #{tpu_custom_call.1} parent=1 // pred_check_branch
      %13 = sbr.rel (0) target = $region9
    $region8: #{tpu_custom_call.1} parent=1 // pred_region
      _
    $region9: #{tpu_custom_call.1} parent=1 // pred_fallthru
      _
    // Predicated region
    $region10: #{tpu_custom_call.1} parent=1 // pred_check
      _
    $region11: #{tpu_custom_call.1} parent=1 // pred_check_branch
      %15 = sbr.rel (0) target = $region13
    $region12: #{tpu_custom_call.1} parent=1 // pred_region
      _
    $region13: #{tpu_custom_call.1} parent=1 // pred_fallthru
      _
    // Predicated region
    $region14: #{tpu_custom_call.1} parent=1 // pred_check
      _
    $region15: #{tpu_custom_call.1} parent=1 // pred_check_branch
      %17 = sbr.rel (0) target = $region17
    $region16: #{tpu_custom_call.1} parent=1 // pred_region
      _
    $region17: #{tpu_custom_call.1} parent=1 // pred_fallthru
      _
    %v18 = vld [vmem:[%s0] sm:$0xf]
    %v19 = vld [vmem:[%s1] sm:$0xff]
    %v21 = vlaneseq
    %v22 = vshrl.u32 %v21, 7
    %v23 = vsub.s32 0, %v22
    %v24 = vrot.slane %v18, %v23
    %v25 = vlaneseq
    %v26 = vshrl.u32 %v25, 7
    %v27 = vsub.s32 2, %v26
    %v28 = vrot.slane %v18, %v27
    %v31 = vlaneseq
    %v32 = vshrl.u32 %v31, 7
    %v33 = vsub.s32 0, %v32
    %v34 = vrot.slane %v24, %v33
    %v35 = vlaneseq
    %v36 = vshrl.u32 %v35, 7
    %v37 = vsub.s32 0, %v36
    %v38 = vrot.slane %v28, %v37
    %40 = vset.pattern.permute.xlu0 0
    %41 = vperm.xlu0 %40, %v19
    %v42 = vpop.permute.xlu0 %41
    %v44 = vsub.f32 %v34, %v42
    %v45 = vsub.f32 %v38, %v42
    %v46 = vld [vmem:[%s2] sm:$0xff]
    %v47 = vlaneseq
    %v48 = vshrl.u32 %v47, 7
    %v49 = vsub.s32 1, %v48
    %v50 = vrot.slane %v18, %v49
    %v51 = vlaneseq
    %v52 = vshrl.u32 %v51, 7
    %v53 = vsub.s32 3, %v52
    %v54 = vrot.slane %v18, %v53
    %v57 = vlaneseq
    %v58 = vshrl.u32 %v57, 7
    %v59 = vsub.s32 1, %v58
    %v60 = vrot.slane %v50, %v59
    %v61 = vlaneseq
    %v62 = vshrl.u32 %v61, 7
    %v63 = vsub.s32 1, %v62
    %v64 = vrot.slane %v54, %v63
    %66 = vset.pattern.permute.xlu0 0
    %67 = vperm.xlu0 %66, %v46
    %v68 = vpop.permute.xlu0 %67
    %v70 = vsub.f32 %v60, %v68
    %v71 = vsub.f32 %v64, %v68
    %v72 = vmul.f32 %v44, %v44
    %v73 = vmul.f32 %v45, %v45
    %v74 = vmul.f32 %v72, -20.0
    %v75 = vmul.f32 %v73, -20.0
    %v76 = vmul.f32 %v74, 1.442695
    %v77 = vpow.pop %v76
    %v78 = vmul.f32 %v75, 1.442695
    %v79 = vpow.pop %v78
    %v80 = vmul.f32 %v70, %v70
    %v81 = vmul.f32 %v71, %v71
    %v82 = vmul.f32 %v80, -20.0
    %v83 = vmul.f32 %v81, -20.0
    %v84 = vmul.f32 %v82, 1.442695
    %v85 = vpow.pop %v84
    %v86 = vmul.f32 %v83, 1.442695
    %v87 = vpow.pop %v86
    %v88 = vld [vmem:[%s3] sm:$0xff]
    %v89 = vld [vmem:[%s3 + $0x8] sm:$0xff]
    %vm90 = vcmask 64512
    %v92 = vsel %vm90, %v88, 0
    %v95 = vsel %vm90, %v89, 0
    %97 = vmatprep.subr.mxu0 %v79
    %98 = vmatpush1.msra.mxu0 %v77
    %99 = vmatprep.subr.mxu0 0.0
    %100 = vmatpush1.msra.mxu0 0.0
    %101 = vmatprep.subr.mxu0 0.0
    %102 = vmatpush1.msra.mxu0 0.0
    %103 = vmatprep.subr.mxu0 0.0
    %104 = vmatpush1.msra.mxu0 0.0
    %105 = vmatprep.subr.mxu0 0.0
    %106 = vmatpush1.msra.mxu0 0.0
    %107 = vmatprep.subr.mxu0 0.0
    %108 = vmatpush1.msra.mxu0 0.0
    %109 = vmatprep.subr.mxu0 0.0
    %110 = vmatpush1.msra.mxu0 0.0
    %111 = vmatprep.subr.mxu0 0.0
    %112 = vmatpush1.msra.mxu0 0.0
    %113 = vmatprep.subr.mxu0 0.0
    %114 = vmatpush1.msra.mxu0 0.0
    %115 = vmatprep.subr.mxu0 0.0
    %116 = vmatpush1.msra.mxu0 0.0
    %117 = vmatprep.subr.mxu0 0.0
    %118 = vmatpush1.msra.mxu0 0.0
    %119 = vmatprep.subr.mxu0 0.0
    %120 = vmatpush1.msra.mxu0 0.0
    %121 = vmatprep.subr.mxu0 0.0
    %122 = vmatpush1.msra.mxu0 0.0
    %123 = vmatprep.subr.mxu0 0.0
    %124 = vmatpush1.msra.mxu0 0.0
    %125 = vmatprep.subr.mxu0 0.0
    %126 = vmatpush1.msra.mxu0 0.0
    %127 = vmatprep.subr.mxu0 0.0
    %128 = vmatpush1.msra.mxu0 0.0
    %129 = vmatprep.subr.mxu0 0.0
    %130 = vmatpush1.msra.mxu0 0.0
    %131 = vmatprep.subr.mxu0 0.0
    %132 = vmatpush1.msra.mxu0 0.0
    %133 = vmatprep.subr.mxu0 0.0
    %134 = vmatpush1.msra.mxu0 0.0
    %135 = vmatprep.subr.mxu0 0.0
    %136 = vmatpush1.msra.mxu0 0.0
    %137 = vmatprep.subr.mxu0 0.0
    %138 = vmatpush1.msra.mxu0 0.0
    %139 = vmatprep.subr.mxu0 0.0
    %140 = vmatpush1.msra.mxu0 0.0
    %141 = vmatprep.subr.mxu0 0.0
    %142 = vmatpush1.msra.mxu0 0.0
    %143 = vmatprep.subr.mxu0 0.0
    %144 = vmatpush1.msra.mxu0 0.0
    %145 = vmatprep.subr.mxu0 0.0
    %146 = vmatpush1.msra.mxu0 0.0
    %147 = vmatprep.subr.mxu0 0.0
    %148 = vmatpush1.msra.mxu0 0.0
    %149 = vmatprep.subr.mxu0 0.0
    %150 = vmatpush1.msra.mxu0 0.0
    %151 = vmatprep.subr.mxu0 0.0
    %152 = vmatpush1.msra.mxu0 0.0
    %153 = vmatprep.subr.mxu0 0.0
    %154 = vmatpush1.msra.mxu0 0.0
    %155 = vmatprep.subr.mxu0 0.0
    %156 = vmatpush1.msra.mxu0 0.0
    %157 = vmatprep.subr.mxu0 0.0
    %158 = vmatpush1.msra.mxu0 0.0
    %159 = vmatprep.subr.mxu0 0.0
    %160 = vmatpush1.msra.mxu0 0.0
    %161 = vmatprep.mubr.f32.mxu0 0.0
    %162 = vmatmul.mubr.f32.gmra.mrb[0].mxu0 %v92
    %v163 = vpop.f32.mrb[0].mxu0
    %v164 = vadd.f32 0.0, %v163
    %v165 = vpop.f32.mrb[0].mxu0
    %v166 = vadd.f32 0.0, %v165
    %167 = vmatprep.mubr.f32.mxu0 0.0
    %168 = vmatmul.mubr.f32.gmra.mrb[0].mxu0 %v95
    %v169 = vpop.f32.mrb[0].mxu0
    %v170 = vadd.f32 0.0, %v169
    %v171 = vpop.f32.mrb[0].mxu0
    %v172 = vadd.f32 0.0, %v171
    %173 = vdwg.mxu0
    %v174 = vmul.f32 %v164, %v85
    %v175 = vmul.f32 %v166, %v87
    %v176 = vrot.slane %v174, 4
    %v177 = vadd.f32 %v174, %v176
    %v178 = vrot.slane %v177, 2
    %v179 = vadd.f32 %v177, %v178
    %v180 = vrot.slane %v179, 1
    %v181 = vadd.f32 %v179, %v180
    %v182 = vrot.slane %v175, 4
    %v183 = vadd.f32 %v175, %v182
    %v184 = vrot.slane %v183, 2
    %v185 = vadd.f32 %v183, %v184
    %v186 = vrot.slane %v185, 1
    %v187 = vadd.f32 %v185, %v186
    %v188 = vmul.f32 %v170, %v85
    %v189 = vmul.f32 %v172, %v87
    %v190 = vrot.slane %v188, 4
    %v191 = vadd.f32 %v188, %v190
    %v192 = vrot.slane %v191, 2
    %v193 = vadd.f32 %v191, %v192
    %v194 = vrot.slane %v193, 1
    %v195 = vadd.f32 %v193, %v194
    %v196 = vrot.slane %v189, 4
    %v197 = vadd.f32 %v189, %v196
    %v198 = vrot.slane %v197, 2
    %v199 = vadd.f32 %v197, %v198
    %v200 = vrot.slane %v199, 1
    %v201 = vadd.f32 %v199, %v200
    %vm202 = vcmask 1040384
    %v203 = vsel %vm202, %v181, %v195
    %v204 = vsel %vm202, %v187, %v201
    %v207 = vcombine.low %v203, %v204
    %v209 = vunpack.c.l.s4 1983009808
    %v210 = vunpack.c.0.s8 %v209
    %v211 = vlaneseq
    %v212 = vshrl.u32 %v211, 7
    %v213 = vsub.s32 %v210, %v212
    %v214 = vrot.slane %v207, %v213
    %216 = vst [vmem:[#allocation2] sm:$0xf] %v214
    // Predicated region
    $region18: #{tpu_custom_call.1} parent=1 // pred_check
      _
    $region19: #{tpu_custom_call.1} parent=1 // pred_check_branch
      %218 = sbr.rel (0) target = $region21
    $region20: #{tpu_custom_call.1} parent=1 // pred_region
      %s220 = ssub.s32 64, 64
      %221 = vsyncadd [#allocation3], %s220
      %s223 = sshll.u32 [#allocation2], 4
      %s224 = int_to_ptr.vmem [resolvable:$true] %s223
      %226 = dma.vmem_to_hbm [thread:$0]  %s224, 64, %s4, [#allocation3]
    $region21: #{tpu_custom_call.1} parent=1 // pred_fallthru
      _
    // Predicated region
    $region22: #{tpu_custom_call.1} parent=1 // pred_check
      _
    $region23: #{tpu_custom_call.1} parent=1 // pred_check_branch
      %228 = sbr.rel (0) target = $region25
    $region24: #{tpu_custom_call.1} parent=1 // pred_region
      %229 = dma.done [#allocation3], 64
    $region25: #{tpu_custom_call.1} parent=1 // pred_fallthru
      _
    %230 = vsyncpa [#allocation3], 1

</llo_original>
